<compile_context>
chip_gen: v5e
topology: v5e:2x2
jax: 0.10.0
libtpu: 0.0.40
codegen_flags: <defaults>
</compile_context>

<pallas_src>
import jax
import jax.numpy as jnp
from jax import lax
from jax.experimental import pallas as pl
from jax.experimental.pallas import tpu as pltpu


def _round_up(x, m):
    return ((x + m - 1) // m) * m


def baseline_mlp_kernel(x_ref, w1_ref, b1_ref, w2_ref, b2_ref, w3row_ref,
                        b3_ref, o_ref):
    cdt = x_ref.dtype
    # Hidden layer 1: Linear (MXU, f32 accumulate) + bias + ReLU (VPU)
    h = jnp.dot(x_ref[...], w1_ref[...], preferred_element_type=jnp.float32)
    h = jnp.maximum(h + b1_ref[...], 0.0).astype(cdt)
    # Hidden layer 2: Linear (MXU, f32 accumulate) + bias + ReLU (VPU)
    h = jnp.dot(h, w2_ref[...], preferred_element_type=jnp.float32)
    h = jnp.maximum(h + b2_ref[...], 0.0).astype(cdt)
    # Output head (out_features == 1), computed transposed:
    # (1, H) . (tb, H) contracting H -> (1, tb): batch lands on the lane axis,
    # so the store below is lane-dense (no masked single-lane vst.msk).
    v = lax.dot_general(w3row_ref[...], h, (((1,), (1,)), ((), ())),
                        preferred_element_type=jnp.float32)
    o_ref[...] = (v + b3_ref[...]).astype(o_ref.dtype)


def baseline_forward(observations, params, *, tb=None, compute_dtype=None):
    """observations: [B, obs_dim] -> returns [B] float32."""
    w1, b1, w2, b2, w3, b3 = params
    B, D = observations.shape
    H = w1.shape[1]

    # w3 is stored (H, 1); present it as a (1, H) row for the transposed head.
    w3_row = w3.reshape(1, H)

    # Optional reduced-precision input/weight path (v6e/v7x): halves the
    # dominant observation HBM stream; accumulation stays f32 in the kernel.
    cdt = jnp.dtype(compute_dtype) if compute_dtype is not None \
        else observations.dtype
    if observations.dtype != cdt:
        observations = observations.astype(cdt)
    w1c = w1.astype(cdt)
    w2c = w2.astype(cdt)
    w3c = w3_row.astype(cdt)
    b1f = b1.astype(jnp.float32)
    b2f = b2.astype(jnp.float32)
    b3f = b3.astype(jnp.float32)

    # Batch tile selection:
    #  * large (up to 8192 rows) to amortize the fixed per-grid-step cost,
    #  * but no larger than ceil(B/2) (rounded to 128) so the parallel batch
    #    axis has >= 2 steps and v7x's second TensorCore has work,
    #  * multiple of 128 so the lane-dense (1, tb) output block is legal with
    #    a partial last block; if the tile covers the whole batch, use a
    #    single full-array block instead (always legal, no padding at all).
    if tb is None:
        tb = min(8192, _round_up(pl.cdiv(B, 2), 128))
    tb = _round_up(max(int(tb), 8), 128)
    if tb >= B:
        tb = B
    grid = (pl.cdiv(B, tb),)

    obs_spec = pl.BlockSpec((tb, D), lambda i: (i, 0))
    out_spec = pl.BlockSpec((1, tb), lambda i: (0, i))

    def const(shape):
        # Constant index_map -> block stays resident in VMEM across grid steps.
        return pl.BlockSpec(shape, lambda i: tuple(0 for _ in shape))

    itemsize = jnp.dtype(cdt).itemsize
    flops = 2 * B * (D * H + H * H + H)
    bytes_accessed = (B * D * itemsize                       # observations
                      + (D * H + H * H + H) * itemsize       # W1, W2, w3 row
                      + (2 * H + 1) * 4                      # biases (f32)
                      + B * 4)                               # output (f32)

    # VMEM budget derived from the actual buffers (double-buffered obs/out,
    # resident weights, hidden activations), with generous headroom; the
    # scoped default is only 16 MiB on v5e.
    vmem_need = (2 * tb * D * itemsize
                 + 2 * tb * 4
                 + (D * H + H * H + H) * itemsize + (2 * H + 1) * 4
                 + 2 * tb * H * 4)
    vmem_limit = int(min(32 << 20, max(4 * vmem_need, 8 << 20)))

    out_2d = pl.pallas_call(
        baseline_mlp_kernel,
        out_shape=jax.ShapeDtypeStruct((1, B), jnp.float32),
        grid=grid,
        in_specs=[
            obs_spec,           # observations, streamed per batch tile
            const((D, H)),      # W1 (resident across grid steps)
            const((1, H)),      # b1
            const((H, H)),      # W2
            const((1, H)),      # b2
            const((1, H)),      # w3 as a row
            const((1, 1)),      # b3
        ],
        out_specs=out_spec,
        compiler_params=pltpu.CompilerParams(
            dimension_semantics=("parallel",),
            vmem_limit_bytes=vmem_limit),
        cost_estimate=pl.CostEstimate(
            flops=flops, transcendentals=0, bytes_accessed=bytes_accessed),
    )(observations, w1c, b1f, w2c, b2f, w3c, b3f)

    # torch.flatten on [B, 1] -> [B]; here the kernel output is already (1, B).
    return out_2d[0]


def init_params(key, obs_dim, layer_size):
    """Deterministic init mimicking build_mlp(obs_dim, 1, n_layers=2, layer_size)."""
    k1, k2, k3, k4, k5, k6 = jax.random.split(key, 6)
    scale = 0.1
    w1 = scale * jax.random.normal(k1, (obs_dim, layer_size), jnp.float32)
    b1 = scale * jax.random.normal(k2, (1, layer_size), jnp.float32)
    w2 = scale * jax.random.normal(k3, (layer_size, layer_size), jnp.float32)
    b2 = scale * jax.random.normal(k4, (1, layer_size), jnp.float32)
    w3 = scale * jax.random.normal(k5, (layer_size, 1), jnp.float32)
    b3 = scale * jax.random.normal(k6, (1, 1), jnp.float32)
    return (w1, b1, w2, b2, w3, b3)


def reference_forward(observations, params):
    """Pure-JAX reference of the same MLP for a correctness check."""
    w1, b1, w2, b2, w3, b3 = params
    h = jnp.maximum(observations @ w1 + b1, 0.0)
    h = jnp.maximum(h @ w2 + b2, 0.0)
    return (h @ w3 + b3).reshape(-1)


if __name__ == "__main__":
    key = jax.random.PRNGKey(0)
    k_obs, k_params, k_obs2 = jax.random.split(key, 3)

    obs_dim, layer_size = 16, 32

    # Case 1: multi-tile batch (default tiling -> 2 steps of 256, last partial;
    # exercises the megacore split and the masked partial-block path).
    batch = 300
    observations = jax.random.normal(k_obs, (batch, obs_dim), jnp.float32)
    params = init_params(k_params, obs_dim, layer_size)
    ref = reference_forward(observations, params)

    out = jax.block_until_ready(baseline_forward(observations, params))
    assert out.ndim == 1 and out.shape == (batch,)
    assert jnp.allclose(out, ref, atol=1e-5, rtol=1e-4)

    # Case 2: explicit smaller tile -> 3 grid steps (128, 128, 44 partial).
    out_t = jax.block_until_ready(baseline_forward(observations, params, tb=128))
    assert jnp.allclose(out_t, ref, atol=1e-5, rtol=1e-4)

    # Case 3: small batch -> single full-array block (no padding path at all).
    batch_s = 50
    observations_s = jax.random.normal(k_obs2, (batch_s, obs_dim), jnp.float32)
    ref_s = reference_forward(observations_s, params)
    out_s = jax.block_until_ready(baseline_forward(observations_s, params))
    assert out_s.shape == (batch_s,)
    assert jnp.allclose(out_s, ref_s, atol=1e-5, rtol=1e-4)

    # Case 4: bf16 input/weight path (v6e/v7x HBM saving), f32 accumulation.
    out_bf = jax.block_until_ready(
        baseline_forward(observations, params, compute_dtype=jnp.bfloat16))
    assert jnp.allclose(out_bf, ref, atol=5e-2, rtol=5e-2)

    print("KERNEL_OK")
</pallas_src>

<mosaic_0001>
module attributes {stable_mosaic.version = 11 : i64} {
  func.func @baseline_mlp_kernel(%arg0: i32, %arg1: memref<256x16xf32, #tpu.memory_space<vmem>>, %arg2: memref<16x32xf32, #tpu.memory_space<vmem>>, %arg3: memref<1x32xf32, #tpu.memory_space<vmem>>, %arg4: memref<32x32xf32, #tpu.memory_space<vmem>>, %arg5: memref<1x32xf32, #tpu.memory_space<vmem>>, %arg6: memref<1x32xf32, #tpu.memory_space<vmem>>, %arg7: memref<1x1xf32, #tpu.memory_space<vmem>>, %arg8: memref<1x256xf32, #tpu.memory_space<vmem>>) attributes {dimension_semantics = [#tpu.dimension_semantics<parallel>], iteration_bounds = array<i64: 2>, scalar_prefetch = 0 : i64, scratch_operands = 0 : i64, tpu.core_type = #tpu.core_type<tc>, window_params = [{transform_indices = @transform_0, window_bounds = array<i64: 256, 16>}, {pipeline_mode = #tpu.pipeline_mode<synchronous>, transform_indices = @transform_1, window_bounds = array<i64: 16, 32>}, {pipeline_mode = #tpu.pipeline_mode<synchronous>, transform_indices = @transform_2, window_bounds = array<i64: 1, 32>}, {pipeline_mode = #tpu.pipeline_mode<synchronous>, transform_indices = @transform_3, window_bounds = array<i64: 32, 32>}, {pipeline_mode = #tpu.pipeline_mode<synchronous>, transform_indices = @transform_4, window_bounds = array<i64: 1, 32>}, {pipeline_mode = #tpu.pipeline_mode<synchronous>, transform_indices = @transform_5, window_bounds = array<i64: 1, 32>}, {pipeline_mode = #tpu.pipeline_mode<synchronous>, transform_indices = @transform_6, window_bounds = array<i64: 1, 1>}, {transform_indices = @transform_7, window_bounds = array<i64: 1, 256>}]} {
    %c0 = arith.constant 0 : index
    %c0_0 = arith.constant 0 : index
    %0 = vector.load %arg1[%c0, %c0_0] : memref<256x16xf32, #tpu.memory_space<vmem>>, vector<256x16xf32>
    %c0_1 = arith.constant 0 : index
    %c0_2 = arith.constant 0 : index
    %1 = vector.load %arg2[%c0_1, %c0_2] : memref<16x32xf32, #tpu.memory_space<vmem>>, vector<16x32xf32>
    %cst = arith.constant dense<0.000000e+00> : vector<256x32xf32>
    %2 = tpu.matmul %0, %1, %cst {dimension_numbers = #tpu.dot_dimension_numbers<[1], [0], [0], [1], [0, 0, 1, 1], [], []>} : vector<256x16xf32>, vector<16x32xf32>, vector<256x32xf32> -> vector<256x32xf32>
    %c0_3 = arith.constant 0 : index
    %c0_4 = arith.constant 0 : index
    %3 = vector.load %arg3[%c0_3, %c0_4] : memref<1x32xf32, #tpu.memory_space<vmem>>, vector<1x32xf32>
    %4 = vector.broadcast %3 : vector<1x32xf32> to vector<256x32xf32>
    %5 = arith.addf %2, %4 : vector<256x32xf32>
    %cst_5 = arith.constant 0.000000e+00 : f32
    %6 = vector.broadcast %cst_5 : f32 to vector<256x32xf32>
    %7 = arith.maximumf %5, %6 : vector<256x32xf32>
    %c0_6 = arith.constant 0 : index
    %c0_7 = arith.constant 0 : index
    %8 = vector.load %arg4[%c0_6, %c0_7] : memref<32x32xf32, #tpu.memory_space<vmem>>, vector<32x32xf32>
    %cst_8 = arith.constant dense<0.000000e+00> : vector<256x32xf32>
    %9 = tpu.matmul %7, %8, %cst_8 {dimension_numbers = #tpu.dot_dimension_numbers<[1], [0], [0], [1], [0, 0, 1, 1], [], []>} : vector<256x32xf32>, vector<32x32xf32>, vector<256x32xf32> -> vector<256x32xf32>
    %c0_9 = arith.constant 0 : index
    %c0_10 = arith.constant 0 : index
    %10 = vector.load %arg5[%c0_9, %c0_10] : memref<1x32xf32, #tpu.memory_space<vmem>>, vector<1x32xf32>
    %11 = vector.broadcast %10 : vector<1x32xf32> to vector<256x32xf32>
    %12 = arith.addf %9, %11 : vector<256x32xf32>
    %cst_11 = arith.constant 0.000000e+00 : f32
    %13 = vector.broadcast %cst_11 : f32 to vector<256x32xf32>
    %14 = arith.maximumf %12, %13 : vector<256x32xf32>
    %c0_12 = arith.constant 0 : index
    %c0_13 = arith.constant 0 : index
    %15 = vector.load %arg6[%c0_12, %c0_13] : memref<1x32xf32, #tpu.memory_space<vmem>>, vector<1x32xf32>
    %cst_14 = arith.constant dense<0.000000e+00> : vector<1x256xf32>
    %16 = tpu.matmul %15, %14, %cst_14 {dimension_numbers = #tpu.dot_dimension_numbers<[1], [1], [0], [0], [0, 0, 1, 0], [], []>} : vector<1x32xf32>, vector<256x32xf32>, vector<1x256xf32> -> vector<1x256xf32>
    %c0_15 = arith.constant 0 : index
    %c0_16 = arith.constant 0 : index
    %17 = vector.load %arg7[%c0_15, %c0_16] : memref<1x1xf32, #tpu.memory_space<vmem>>, vector<1x1xf32>
    %18 = vector.broadcast %17 : vector<1x1xf32> to vector<1x256xf32>
    %19 = arith.addf %16, %18 : vector<1x256xf32>
    %c0_17 = arith.constant 0 : index
    %c0_18 = arith.constant 0 : index
    %20 = vector.load %arg8[%c0_17, %c0_18] : memref<1x256xf32, #tpu.memory_space<vmem>>, vector<1x256xf32>
    tpu.vector_store %arg8[%c0_17, %c0_18], %19 {strides = array<i32>} : memref<1x256xf32, #tpu.memory_space<vmem>>, vector<1x256xf32>,
    return
  }
  func.func @transform_0(%arg0: i32) -> (i32, i32) {
    %c0_i32 = arith.constant 0 : i32
    %c0_i32_0 = arith.constant 0 : i32
    return %arg0, %c0_i32 : i32, i32
  }
  func.func @transform_1(%arg0: i32) -> (i32, i32) {
    %c0_i32 = arith.constant 0 : i32
    %c0_i32_0 = arith.constant 0 : i32
    %c0_i32_1 = arith.constant 0 : i32
    return %c0_i32, %c0_i32_0 : i32, i32
  }
  func.func @transform_2(%arg0: i32) -> (i32, i32) {
    %c0_i32 = arith.constant 0 : i32
    %c0_i32_0 = arith.constant 0 : i32
    %c0_i32_1 = arith.constant 0 : i32
    return %c0_i32, %c0_i32_0 : i32, i32
  }
  func.func @transform_3(%arg0: i32) -> (i32, i32) {
    %c0_i32 = arith.constant 0 : i32
    %c0_i32_0 = arith.constant 0 : i32
    %c0_i32_1 = arith.constant 0 : i32
    return %c0_i32, %c0_i32_0 : i32, i32
  }
  func.func @transform_4(%arg0: i32) -> (i32, i32) {
    %c0_i32 = arith.constant 0 : i32
    %c0_i32_0 = arith.constant 0 : i32
    %c0_i32_1 = arith.constant 0 : i32
    return %c0_i32, %c0_i32_0 : i32, i32
  }
  func.func @transform_5(%arg0: i32) -> (i32, i32) {
    %c0_i32 = arith.constant 0 : i32
    %c0_i32_0 = arith.constant 0 : i32
    %c0_i32_1 = arith.constant 0 : i32
    return %c0_i32, %c0_i32_0 : i32, i32
  }
  func.func @transform_6(%arg0: i32) -> (i32, i32) {
    %c0_i32 = arith.constant 0 : i32
    %c0_i32_0 = arith.constant 0 : i32
    %c0_i32_1 = arith.constant 0 : i32
    return %c0_i32, %c0_i32_0 : i32, i32
  }
  func.func @transform_7(%arg0: i32) -> (i32, i32) {
    %c0_i32 = arith.constant 0 : i32
    %c0_i32_0 = arith.constant 0 : i32
    return %c0_i32, %arg0 : i32, i32
  }
}

</mosaic_0001>

<llo_original>
// kernel: tpu_custom_call.1
$region0: #{tpu_custom_call.1}
  #allocation0 [shape = 'u32[]', space=smem, size = 0x4, offset = 0x4, fixed_abs, tag = 'smem constant byte address 0x4 - core index']
  #allocation1 [shape = 'u32[72,128]{1,0:T(1,128)}', space=vmem, size = 0x9000, scoped, tag = 'internal scratch']
  #allocation2 [shape = 'f32[1,1]{1,0:T(1,128)S(1)}', space=vmem, size = 0x200, scoped, tag = 'scoped memory for tpu_custom_call.1']
  %s0 = inlined_call_operand.vmem [shape: f32[300,16], index: 0, kind: input, shape index: {}]
  %s1 = inlined_call_operand.vmem [shape: f32[16,32], index: 1, kind: input, shape index: {}]
  %s2 = inlined_call_operand.vmem [shape: f32[1,32], index: 2, kind: input, shape index: {}]
  %s3 = inlined_call_operand.vmem [shape: f32[32,32], index: 3, kind: input, shape index: {}]
  %s4 = inlined_call_operand.vmem [shape: f32[1,32], index: 4, kind: input, shape index: {}]
  %s5 = inlined_call_operand.vmem [shape: f32[1,32], index: 5, kind: input, shape index: {}]
  %s6 = inlined_call_operand.<no memory space> [shape: f32[1,1], index: 6, kind: input, shape index: {}]
  %s7 = inlined_call_operand.hbm [shape: f32[1,300], index: 7, kind: output, shape index: {}]
  %s8 = sld [smem:[#allocation0]]
  $region61: #{tpu_custom_call.1} parent=0
    _
  %s10 = ssub.s32 1, %s8
  %s11 = scalar_select 0, %s10, %s8
  %v12 = vstv %s6
  %13 = vst [vmem:[#allocation2] sm:$0x1] %v12
  $region1: #{tpu_custom_call.1} parent=0
    #allocation3 [shape = 'u8[2048]{0}', space=vmem, size = 0x800, scoped, tag = 'output window, operand 0']
    #allocation4 [shape = 's32[2]{0}', space=sflag, size = 0x8, scoped, tag = 'scoped memory for tpu_custom_call.1']
    %14 = vsyncpa [#allocation4], 0
    %s15 = scalar_lea.sflag [#allocation4], 1
    %16 = vsyncpa %s15, 0
    loop: start=0, step=1, limit=4
    $region2: #{tpu_custom_call.1} parent=1 // loop_pre_header
      _
    $region3: #{tpu_custom_call.1} parent=1 // loop_header
      %s18 = sphi 0, %s22
      %p19 = scmp.ge.s32.totalorder %s18, 4
      %s28 = sphi 0, %s30
      %s31 = sphi 0, %s28
      %s32 = sphi 0, %s31
      %s48 = sphi 0, %s32
      %s52 = sphi 0, %s52
      %s54 = sphi 0, %s52
      %s55 = sphi 0, %s54
      %s69 = sphi 0, %s55
      %s73 = sphi 0, %s73
      %s75 = sphi 0, %s73
      %s76 = sphi 0, %s75
      %s90 = sphi 0, %s76
      %s94 = sphi 0, %s94
      %s96 = sphi 0, %s94
      %s97 = sphi 0, %s96
      %s111 = sphi 0, %s97
      %s115 = sphi 0, %s115
      %s117 = sphi 0, %s115
      %s118 = sphi 0, %s117
      %s132 = sphi 0, %s118
      %s136 = sphi 0, %s136
      %s138 = sphi 0, %s136
      %s139 = sphi 0, %s138
      %s153 = sphi 0, %s139
      %s157 = sphi 0, %s157
      %s159 = sphi 0, %s157
      %s160 = sphi 0, %s159
      %s174 = sphi 0, %s160
      %s180 = sphi 0, %s182
      %s183 = sphi 0, %s180
      %s184 = sphi 0, %s183
      %s200 = sphi 0, %s184
    $region4: #{tpu_custom_call.1} parent=1 // loop_header_branch
      %21 = sbr.rel (%p19) target = $region8
    $region5: #{tpu_custom_call.1} parent=1 // loop_body
      %s23 = ssub.s32 %s18, 1
      %s24 = ssub.s32 %s18, 2
      %s25 = sadd.s32 %s18, 1
      %s26 = ssub.s32 %s18, %s25
      %p27 = scmp.eq.s32.totalorder %s26, 0
      %s29 = sadd.s32 %s28, 1
      %s30 = scalar_select %p27, %s28, %s29
      %p33 = pneg %p27
      %p34 = scmp.eq.s32.totalorder %s18, 1
      %p35 = por %p33, %p34
      %p36 = scmp.ne.s32.totalorder %s28, %s31
      %p37 = scmp.eq.s32.totalorder %s18, 0
      %p38 = por %p36, %p37
      %p39 = scmp.ne.s32.totalorder %s28, %s31
      %p40 = scmp.eq.s32.totalorder %s23, 1
      %p41 = por %p39, %p40
      %p42 = scmp.ne.s32.totalorder %s31, %s32
      %p43 = scmp.eq.s32.totalorder %s23, 0
      %p44 = por %p42, %p43
      %p45 = scmp.ne.s32.totalorder %s31, %s32
      %p46 = scmp.eq.s32.totalorder %s24, 1
      %p47 = por %p45, %p46
      %p49 = scmp.ne.s32.totalorder %s32, %s48
      %p50 = scmp.eq.s32.totalorder %s24, 0
      %p51 = por %p49, %p50
      %s53 = sadd.s32 %s52, 1
      %p56 = scmp.eq.s32.totalorder %s18, 1
      %p57 = scmp.ne.s32.totalorder %s52, %s54
      %p58 = scmp.eq.s32.totalorder %s18, 0
      %p59 = por %p57, %p58
      %p60 = scmp.ne.s32.totalorder %s52, %s54
      %p61 = scmp.eq.s32.totalorder %s23, 1
      %p62 = por %p60, %p61
      %p63 = scmp.ne.s32.totalorder %s54, %s55
      %p64 = scmp.eq.s32.totalorder %s23, 0
      %p65 = por %p63, %p64
      %p66 = scmp.ne.s32.totalorder %s54, %s55
      %p67 = scmp.eq.s32.totalorder %s24, 1
      %p68 = por %p66, %p67
      %p70 = scmp.ne.s32.totalorder %s55, %s69
      %p71 = scmp.eq.s32.totalorder %s24, 0
      %p72 = por %p70, %p71
      %s74 = sadd.s32 %s73, 1
      %p77 = scmp.eq.s32.totalorder %s18, 1
      %p78 = scmp.ne.s32.totalorder %s73, %s75
      %p79 = scmp.eq.s32.totalorder %s18, 0
      %p80 = por %p78, %p79
      %p81 = scmp.ne.s32.totalorder %s73, %s75
      %p82 = scmp.eq.s32.totalorder %s23, 1
      %p83 = por %p81, %p82
      %p84 = scmp.ne.s32.totalorder %s75, %s76
      %p85 = scmp.eq.s32.totalorder %s23, 0
      %p86 = por %p84, %p85
      %p87 = scmp.ne.s32.totalorder %s75, %s76
      %p88 = scmp.eq.s32.totalorder %s24, 1
      %p89 = por %p87, %p88
      %p91 = scmp.ne.s32.totalorder %s76, %s90
      %p92 = scmp.eq.s32.totalorder %s24, 0
      %p93 = por %p91, %p92
      %s95 = sadd.s32 %s94, 1
      %p98 = scmp.eq.s32.totalorder %s18, 1
      %p99 = scmp.ne.s32.totalorder %s94, %s96
      %p100 = scmp.eq.s32.totalorder %s18, 0
      %p101 = por %p99, %p100
      %p102 = scmp.ne.s32.totalorder %s94, %s96
      %p103 = scmp.eq.s32.totalorder %s23, 1
      %p104 = por %p102, %p103
      %p105 = scmp.ne.s32.totalorder %s96, %s97
      %p106 = scmp.eq.s32.totalorder %s23, 0
      %p107 = por %p105, %p106
      %p108 = scmp.ne.s32.totalorder %s96, %s97
      %p109 = scmp.eq.s32.totalorder %s24, 1
      %p110 = por %p108, %p109
      %p112 = scmp.ne.s32.totalorder %s97, %s111
      %p113 = scmp.eq.s32.totalorder %s24, 0
      %p114 = por %p112, %p113
      %s116 = sadd.s32 %s115, 1
      %p119 = scmp.eq.s32.totalorder %s18, 1
      %p120 = scmp.ne.s32.totalorder %s115, %s117
      %p121 = scmp.eq.s32.totalorder %s18, 0
      %p122 = por %p120, %p121
      %p123 = scmp.ne.s32.totalorder %s115, %s117
      %p124 = scmp.eq.s32.totalorder %s23, 1
      %p125 = por %p123, %p124
      %p126 = scmp.ne.s32.totalorder %s117, %s118
      %p127 = scmp.eq.s32.totalorder %s23, 0
      %p128 = por %p126, %p127
      %p129 = scmp.ne.s32.totalorder %s117, %s118
      %p130 = scmp.eq.s32.totalorder %s24, 1
      %p131 = por %p129, %p130
      %p133 = scmp.ne.s32.totalorder %s118, %s132
      %p134 = scmp.eq.s32.totalorder %s24, 0
      %p135 = por %p133, %p134
      %s137 = sadd.s32 %s136, 1
      %p140 = scmp.eq.s32.totalorder %s18, 1
      %p141 = scmp.ne.s32.totalorder %s136, %s138
      %p142 = scmp.eq.s32.totalorder %s18, 0
      %p143 = por %p141, %p142
      %p144 = scmp.ne.s32.totalorder %s136, %s138
      %p145 = scmp.eq.s32.totalorder %s23, 1
      %p146 = por %p144, %p145
      %p147 = scmp.ne.s32.totalorder %s138, %s139
      %p148 = scmp.eq.s32.totalorder %s23, 0
      %p149 = por %p147, %p148
      %p150 = scmp.ne.s32.totalorder %s138, %s139
      %p151 = scmp.eq.s32.totalorder %s24, 1
      %p152 = por %p150, %p151
      %p154 = scmp.ne.s32.totalorder %s139, %s153
      %p155 = scmp.eq.s32.totalorder %s24, 0
      %p156 = por %p154, %p155
      %s158 = sadd.s32 %s157, 1
      %p161 = scmp.eq.s32.totalorder %s18, 1
      %p162 = scmp.ne.s32.totalorder %s157, %s159
      %p163 = scmp.eq.s32.totalorder %s18, 0
      %p164 = por %p162, %p163
      %p165 = scmp.ne.s32.totalorder %s157, %s159
      %p166 = scmp.eq.s32.totalorder %s23, 1
      %p167 = por %p165, %p166
      %p168 = scmp.ne.s32.totalorder %s159, %s160
      %p169 = scmp.eq.s32.totalorder %s23, 0
      %p170 = por %p168, %p169
      %p171 = scmp.ne.s32.totalorder %s159, %s160
      %p172 = scmp.eq.s32.totalorder %s24, 1
      %p173 = por %p171, %p172
      %p175 = scmp.ne.s32.totalorder %s160, %s174
      %p176 = scmp.eq.s32.totalorder %s24, 0
      %p177 = por %p175, %p176
      %s178 = ssub.s32 %s18, %s25
      %p179 = scmp.eq.s32.totalorder %s178, 0
      %s181 = sadd.s32 %s180, 1
      %s182 = scalar_select %p179, %s180, %s181
      %p185 = pneg %p179
      %p186 = scmp.eq.s32.totalorder %s18, 1
      %p187 = por %p185, %p186
      %p188 = scmp.ne.s32.totalorder %s180, %s183
      %p189 = scmp.eq.s32.totalorder %s18, 0
      %p190 = por %p188, %p189
      %p191 = scmp.ne.s32.totalorder %s180, %s183
      %p192 = scmp.eq.s32.totalorder %s23, 1
      %p193 = por %p191, %p192
      %p194 = scmp.ne.s32.totalorder %s183, %s184
      %p195 = scmp.eq.s32.totalorder %s23, 0
      %p196 = por %p194, %p195
      %p197 = scmp.ne.s32.totalorder %s183, %s184
      %p198 = scmp.eq.s32.totalorder %s24, 1
      %p199 = por %p197, %p198
      %p201 = scmp.ne.s32.totalorder %s184, %s200
      %p202 = scmp.eq.s32.totalorder %s24, 0
      %p203 = por %p201, %p202
      %p204 = scmp.le.s32.totalorder 1, %s18
      %p205 = scmp.lt.s32.totalorder %s18, 3
      %p206 = pnand %p204, %p205
      %p207 = pneg %p206
      // Predicated region
      $region9: #{tpu_custom_call.1} parent=5 // pred_check
        _
      $region10: #{tpu_custom_call.1} parent=5 // pred_check_branch
        %209 = sbr.rel (%p206) target = $region12
      $region11: #{tpu_custom_call.1} parent=5 // pred_region
        %s210 = ssub.s32 %s18, 1
        // Predicated region
        $region13: #{tpu_custom_call.1} parent=11 // pred_check
          %p211 = pneg %p65
        $region14: #{tpu_custom_call.1} parent=11 // pred_check_branch
          %213 = sbr.rel (%p211) target = $region16
        $region15: #{tpu_custom_call.1} parent=11 // pred_region
          _
        $region16: #{tpu_custom_call.1} parent=11 // pred_fallthru
          _
        // Predicated region
        $region17: #{tpu_custom_call.1} parent=11 // pred_check
          %p214 = pneg %p86
        $region18: #{tpu_custom_call.1} parent=11 // pred_check_branch
          %216 = sbr.rel (%p214) target = $region20
        $region19: #{tpu_custom_call.1} parent=11 // pred_region
          _
        $region20: #{tpu_custom_call.1} parent=11 // pred_fallthru
          _
        // Predicated region
        $region21: #{tpu_custom_call.1} parent=11 // pred_check
          %p217 = pneg %p107
        $region22: #{tpu_custom_call.1} parent=11 // pred_check_branch
          %219 = sbr.rel (%p217) target = $region24
        $region23: #{tpu_custom_call.1} parent=11 // pred_region
          _
        $region24: #{tpu_custom_call.1} parent=11 // pred_fallthru
          _
        // Predicated region
        $region25: #{tpu_custom_call.1} parent=11 // pred_check
          %p220 = pneg %p128
        $region26: #{tpu_custom_call.1} parent=11 // pred_check_branch
          %222 = sbr.rel (%p220) target = $region28
        $region27: #{tpu_custom_call.1} parent=11 // pred_region
          _
        $region28: #{tpu_custom_call.1} parent=11 // pred_fallthru
          _
        // Predicated region
        $region29: #{tpu_custom_call.1} parent=11 // pred_check
          %p223 = pneg %p149
        $region30: #{tpu_custom_call.1} parent=11 // pred_check_branch
          %225 = sbr.rel (%p223) target = $region32
        $region31: #{tpu_custom_call.1} parent=11 // pred_region
          _
        $region32: #{tpu_custom_call.1} parent=11 // pred_fallthru
          _
        // Predicated region
        $region33: #{tpu_custom_call.1} parent=11 // pred_check
          %p226 = pneg %p170
        $region34: #{tpu_custom_call.1} parent=11 // pred_check_branch
          %228 = sbr.rel (%p226) target = $region36
        $region35: #{tpu_custom_call.1} parent=11 // pred_region
          _
        $region36: #{tpu_custom_call.1} parent=11 // pred_fallthru
          _
      $region12: #{tpu_custom_call.1} parent=5 // pred_fallthru
        _
      %p229 = scmp.lt.s32.totalorder %s18, 2
      // Predicated region
      $region37: #{tpu_custom_call.1} parent=5 // pred_check
        %p230 = pneg %p229
      $region38: #{tpu_custom_call.1} parent=5 // pred_check_branch
        %232 = sbr.rel (%p230) target = $region40
      $region39: #{tpu_custom_call.1} parent=5 // pred_region
        // Predicated region
        $region41: #{tpu_custom_call.1} parent=39 // pred_check
          %p233 = pneg %p38
        $region42: #{tpu_custom_call.1} parent=39 // pred_check_branch
          %235 = sbr.rel (%p233) target = $region44
        $region43: #{tpu_custom_call.1} parent=39 // pred_region
          %s236 = smul.u32 32, %s18
          %s237 = ssub.s32 38, %s236
          %p238 = scmp.lt.s32.totalorder %s237, 32
          %s239 = scalar_select %p238, %s237, 32
          %s240 = smul.u32 8, %s239
          %p241 = scmp.lt.s32.totalorder %s236, 37
          %s242 = scalar_select %p241, %s236, 37
          %s243 = smul.addr %s242, 8
          %s244 = scalar_lea.vmem %s0, %s243
          %s245 = smul.u32 32, %s18
          %s246 = ssub.s32 38, %s245
          %p247 = scmp.lt.s32.totalorder %s246, 32
          %s248 = scalar_select %p247, %s246, 32
          %s249 = smul.u32 8, %s248
        $region44: #{tpu_custom_call.1} parent=39 // pred_fallthru
          _
      $region40: #{tpu_custom_call.1} parent=5 // pred_fallthru
        _
      %p250 = scmp.le.s32.totalorder 1, %s18
      %p251 = scmp.lt.s32.totalorder %s18, 3
      %p252 = pnand %p250, %p251
      %p253 = pneg %p252
      // Predicated region
      $region45: #{tpu_custom_call.1} parent=5 // pred_check
        _
      $region46: #{tpu_custom_call.1} parent=5 // pred_check_branch
        %255 = sbr.rel (%p252) target = $region48
      $region47: #{tpu_custom_call.1} parent=5 // pred_region
        %s256 = ssub.s32 %s18, 1
        %s257 = smul.u32 32, %s23
        %s258 = ssub.s32 38, %s257
        %p259 = scmp.lt.s32.totalorder %s258, 32
        %s260 = scalar_select %p259, %s258, 32
        %s261 = smul.u32 8, %s260
        %p262 = scmp.lt.s32.totalorder %s257, 37
        %s263 = scalar_select %p262, %s257, 37
        %s264 = smul.addr %s263, 8
        %s265 = scalar_lea.vmem %s0, %s264
        %p266 = pneg %p44
        %p267 = pneg %p41
        %p268 = pneg %p65
        %p269 = pneg %p62
        %p270 = pneg %p86
        %p271 = pneg %p83
        %p272 = pneg %p107
        %p273 = pneg %p104
        %p274 = pneg %p128
        %p275 = pneg %p125
        %p276 = pneg %p149
        %p277 = pneg %p146
        %p278 = pneg %p170
        %p279 = pneg %p167
        %p280 = pneg %p196
        %p281 = pneg %p193
        %s282 = sand.u32 %s183, 1
        %s283 = scalar_lea.sflag [#allocation4], %s282
        %s284 = sand.u32 %s183, 1
        %s285 = smul.addr %s284, 2
        %s286 = scalar_lea.vmem [#allocation3], %s285
        %s287 = smul.u32 32, %s23
        %s288 = ssub.s32 38, %s287
        %p289 = scmp.lt.s32.totalorder %s288, 32
        %s290 = scalar_select %p289, %s288, 32
        %s291 = smul.u32 8, %s290
        %p292 = scmp.lt.s32.totalorder %s287, 37
        %s293 = scalar_select %p292, %s287, 37
        %s294 = smul.addr %s293, 8
        %s295 = scalar_lea.vmem %s0, %s294
        %s296 = smul.u32 32, %s23
        %s297 = ssub.s32 38, %s296
        %p298 = scmp.lt.s32.totalorder %s297, 32
        %s299 = scalar_select %p298, %s297, 32
        %s300 = smul.u32 8, %s299
        %s301 = smul.u32 2, %s23
        %s302 = ssub.s32 3, %s301
        %p303 = scmp.lt.s32.totalorder %s302, 2
        %s304 = scalar_select %p303, %s302, 2
        %v305 = vld [vmem:[%s295] sm:$0xff]
        %v306 = vld [vmem:[%s295 + $0x8] sm:$0xff]
        %v307 = vld [vmem:[%s295 + $0x10] sm:$0xff]
        %v308 = vld [vmem:[%s295 + $0x18] sm:$0xff]
        %v309 = vld [vmem:[%s295 + $0x20] sm:$0xff]
        %v310 = vld [vmem:[%s295 + $0x28] sm:$0xff]
        %v311 = vld [vmem:[%s295 + $0x30] sm:$0xff]
        %v312 = vld [vmem:[%s295 + $0x38] sm:$0xff]
        %v313 = vld [vmem:[%s295 + $0x40] sm:$0xff]
        %v314 = vld [vmem:[%s295 + $0x48] sm:$0xff]
        %v315 = vld [vmem:[%s295 + $0x50] sm:$0xff]
        %v316 = vld [vmem:[%s295 + $0x58] sm:$0xff]
        %v317 = vld [vmem:[%s295 + $0x60] sm:$0xff]
        %v318 = vld [vmem:[%s295 + $0x68] sm:$0xff]
        %v319 = vld [vmem:[%s295 + $0x70] sm:$0xff]
        %v320 = vld [vmem:[%s295 + $0x78] sm:$0xff]
        %v321 = vld [vmem:[%s295 + $0x80] sm:$0xff]
        %v322 = vld [vmem:[%s295 + $0x88] sm:$0xff]
        %v323 = vld [vmem:[%s295 + $0x90] sm:$0xff]
        %v324 = vld [vmem:[%s295 + $0x98] sm:$0xff]
        %v325 = vld [vmem:[%s295 + $0xa0] sm:$0xff]
        %v326 = vld [vmem:[%s295 + $0xa8] sm:$0xff]
        %v327 = vld [vmem:[%s295 + $0xb0] sm:$0xff]
        %v328 = vld [vmem:[%s295 + $0xb8] sm:$0xff]
        %v329 = vld [vmem:[%s295 + $0xc0] sm:$0xff]
        %v330 = vld [vmem:[%s295 + $0xc8] sm:$0xff]
        %v331 = vld [vmem:[%s295 + $0xd0] sm:$0xff]
        %v332 = vld [vmem:[%s295 + $0xd8] sm:$0xff]
        %v333 = vld [vmem:[%s295 + $0xe0] sm:$0xff]
        %v334 = vld [vmem:[%s295 + $0xe8] sm:$0xff]
        %v335 = vld [vmem:[%s295 + $0xf0] sm:$0xff]
        %v336 = vld [vmem:[%s295 + $0xf8] sm:$0xff]
        %v337 = vld [vmem:[%s1] sm:$0xff]
        %v338 = vld [vmem:[%s1 + $0x8] sm:$0xff]
        %v339 = vld [vmem:[%s2] sm:$0x1]
        %v341 = vperm.slane %v339, 0
        %vm343 = vcmask 130048
        %v345 = vsel %vm343, %v305, 0
        %v348 = vsel %vm343, %v306, 0
        %v351 = vsel %vm343, %v307, 0
        %v354 = vsel %vm343, %v308, 0
        %v357 = vsel %vm343, %v309, 0
        %v360 = vsel %vm343, %v310, 0
        %v363 = vsel %vm343, %v311, 0
        %v366 = vsel %vm343, %v312, 0
        %v369 = vsel %vm343, %v313, 0
        %v372 = vsel %vm343, %v314, 0
        %v375 = vsel %vm343, %v315, 0
        %v378 = vsel %vm343, %v316, 0
        %v381 = vsel %vm343, %v317, 0
        %v384 = vsel %vm343, %v318, 0
        %v387 = vsel %vm343, %v319, 0
        %v390 = vsel %vm343, %v320, 0
        %v393 = vsel %vm343, %v321, 0
        %v396 = vsel %vm343, %v322, 0
        %v399 = vsel %vm343, %v323, 0
        %v402 = vsel %vm343, %v324, 0
        %v405 = vsel %vm343, %v325, 0
        %v408 = vsel %vm343, %v326, 0
        %v411 = vsel %vm343, %v327, 0
        %v414 = vsel %vm343, %v328, 0
        %v417 = vsel %vm343, %v329, 0
        %v420 = vsel %vm343, %v330, 0
        %v423 = vsel %vm343, %v331, 0
        %v426 = vsel %vm343, %v332, 0
        %v429 = vsel %vm343, %v333, 0
        %v432 = vsel %vm343, %v334, 0
        %v435 = vsel %vm343, %v335, 0
        %v438 = vsel %vm343, %v336, 0
        %440 = vmatpush.msra.mxu0 0.0
        %441 = vmatpush.msra.mxu0 0.0
        %442 = vmatpush.msra.mxu0 0.0
        %443 = vmatpush.msra.mxu0 0.0
        %444 = vmatpush.msra.mxu0 0.0
        %445 = vmatpush.msra.mxu0 0.0
        %446 = vmatpush.msra.mxu0 0.0
        %447 = vmatpush.msra.mxu0 0.0
        %448 = vmatpush.msra.mxu0 0.0
        %449 = vmatpush.msra.mxu0 0.0
        %450 = vmatpush.msra.mxu0 0.0
        %451 = vmatpush.msra.mxu0 0.0
        %452 = vmatpush.msra.mxu0 0.0
        %453 = vmatpush.msra.mxu0 0.0
        %454 = vmatpush.msra.mxu0 %v338
        %455 = vmatpush.msra.mxu0 %v337
        %456 = vmatmul.f32.gmra.mxu0 %v345
        %v457 = vpop.f32.mrf.mxu0
        %v458 = vadd.f32 %v341, %v457
        %459 = vmatmul.f32.gmra.mxu0 %v348
        %v460 = vpop.f32.mrf.mxu0
        %v461 = vadd.f32 %v341, %v460
        %462 = vmatmul.f32.gmra.mxu0 %v351
        %v463 = vpop.f32.mrf.mxu0
        %v464 = vadd.f32 %v341, %v463
        %465 = vmatmul.f32.gmra.mxu0 %v354
        %v466 = vpop.f32.mrf.mxu0
        %v467 = vadd.f32 %v341, %v466
        %468 = vmatmul.f32.gmra.mxu0 %v357
        %v469 = vpop.f32.mrf.mxu0
        %v470 = vadd.f32 %v341, %v469
        %471 = vmatmul.f32.gmra.mxu0 %v360
        %v472 = vpop.f32.mrf.mxu0
        %v473 = vadd.f32 %v341, %v472
        %474 = vmatmul.f32.gmra.mxu0 %v363
        %v475 = vpop.f32.mrf.mxu0
        %v476 = vadd.f32 %v341, %v475
        %477 = vmatmul.f32.gmra.mxu0 %v366
        %v478 = vpop.f32.mrf.mxu0
        %v479 = vadd.f32 %v341, %v478
        %480 = vmatmul.f32.gmra.mxu0 %v369
        %v481 = vpop.f32.mrf.mxu0
        %v482 = vadd.f32 %v341, %v481
        %483 = vmatmul.f32.gmra.mxu0 %v372
        %v484 = vpop.f32.mrf.mxu0
        %v485 = vadd.f32 %v341, %v484
        %486 = vmatmul.f32.gmra.mxu0 %v375
        %v487 = vpop.f32.mrf.mxu0
        %v488 = vadd.f32 %v341, %v487
        %489 = vmatmul.f32.gmra.mxu0 %v378
        %v490 = vpop.f32.mrf.mxu0
        %v491 = vadd.f32 %v341, %v490
        %492 = vmatmul.f32.gmra.mxu0 %v381
        %v493 = vpop.f32.mrf.mxu0
        %v494 = vadd.f32 %v341, %v493
        %495 = vmatmul.f32.gmra.mxu0 %v384
        %v496 = vpop.f32.mrf.mxu0
        %v497 = vadd.f32 %v341, %v496
        %498 = vmatmul.f32.gmra.mxu0 %v387
        %v499 = vpop.f32.mrf.mxu0
        %v500 = vadd.f32 %v341, %v499
        %501 = vmatmul.f32.gmra.mxu0 %v390
        %v502 = vpop.f32.mrf.mxu0
        %v503 = vadd.f32 %v341, %v502
        %504 = vmatmul.f32.gmra.mxu0 %v393
        %v505 = vpop.f32.mrf.mxu0
        %v506 = vadd.f32 %v341, %v505
        %507 = vmatmul.f32.gmra.mxu0 %v396
        %v508 = vpop.f32.mrf.mxu0
        %v509 = vadd.f32 %v341, %v508
        %510 = vmatmul.f32.gmra.mxu0 %v399
        %v511 = vpop.f32.mrf.mxu0
        %v512 = vadd.f32 %v341, %v511
        %513 = vmatmul.f32.gmra.mxu0 %v402
        %v514 = vpop.f32.mrf.mxu0
        %v515 = vadd.f32 %v341, %v514
        %516 = vmatmul.f32.gmra.mxu0 %v405
        %v517 = vpop.f32.mrf.mxu0
        %v518 = vadd.f32 %v341, %v517
        %519 = vmatmul.f32.gmra.mxu0 %v408
        %v520 = vpop.f32.mrf.mxu0
        %v521 = vadd.f32 %v341, %v520
        %522 = vmatmul.f32.gmra.mxu0 %v411
        %v523 = vpop.f32.mrf.mxu0
        %v524 = vadd.f32 %v341, %v523
        %525 = vmatmul.f32.gmra.mxu0 %v414
        %v526 = vpop.f32.mrf.mxu0
        %v527 = vadd.f32 %v341, %v526
        %528 = vmatmul.f32.gmra.mxu0 %v417
        %v529 = vpop.f32.mrf.mxu0
        %v530 = vadd.f32 %v341, %v529
        %531 = vmatmul.f32.gmra.mxu0 %v420
        %v532 = vpop.f32.mrf.mxu0
        %v533 = vadd.f32 %v341, %v532
        %534 = vmatmul.f32.gmra.mxu0 %v423
        %v535 = vpop.f32.mrf.mxu0
        %v536 = vadd.f32 %v341, %v535
        %537 = vmatmul.f32.gmra.mxu0 %v426
        %v538 = vpop.f32.mrf.mxu0
        %v539 = vadd.f32 %v341, %v538
        %540 = vmatmul.f32.gmra.mxu0 %v429
        %v541 = vpop.f32.mrf.mxu0
        %v542 = vadd.f32 %v341, %v541
        %543 = vmatmul.f32.gmra.mxu0 %v432
        %v544 = vpop.f32.mrf.mxu0
        %v545 = vadd.f32 %v341, %v544
        %546 = vmatmul.f32.gmra.mxu0 %v435
        %v547 = vpop.f32.mrf.mxu0
        %v548 = vadd.f32 %v341, %v547
        %549 = vmatmul.f32.gmra.mxu0 %v438
        %v550 = vpop.f32.mrf.mxu0
        %v551 = vadd.f32 %v341, %v550
        %552 = vdwg.mxu0
        %v553 = vmax.f32 %v458, 0.0
        %v554 = vmax.f32 %v461, 0.0
        %v555 = vmax.f32 %v464, 0.0
        %v556 = vmax.f32 %v467, 0.0
        %v557 = vmax.f32 %v470, 0.0
        %v558 = vmax.f32 %v473, 0.0
        %v559 = vmax.f32 %v476, 0.0
        %v560 = vmax.f32 %v479, 0.0
        %v561 = vmax.f32 %v482, 0.0
        %v562 = vmax.f32 %v485, 0.0
        %v563 = vmax.f32 %v488, 0.0
        %v564 = vmax.f32 %v491, 0.0
        %v565 = vmax.f32 %v494, 0.0
        %v566 = vmax.f32 %v497, 0.0
        %v567 = vmax.f32 %v500, 0.0
        %v568 = vmax.f32 %v503, 0.0
        %v569 = vmax.f32 %v506, 0.0
        %v570 = vmax.f32 %v509, 0.0
        %v571 = vmax.f32 %v512, 0.0
        %v572 = vmax.f32 %v515, 0.0
        %v573 = vmax.f32 %v518, 0.0
        %v574 = vmax.f32 %v521, 0.0
        %v575 = vmax.f32 %v524, 0.0
        %v576 = vmax.f32 %v527, 0.0
        %v577 = vmax.f32 %v530, 0.0
        %v578 = vmax.f32 %v533, 0.0
        %v579 = vmax.f32 %v536, 0.0
        %v580 = vmax.f32 %v539, 0.0
        %v581 = vmax.f32 %v542, 0.0
        %v582 = vmax.f32 %v545, 0.0
        %v583 = vmax.f32 %v548, 0.0
        %v584 = vmax.f32 %v551, 0.0
        %v585 = vld [vmem:[%s3] sm:$0xff]
        %v586 = vld [vmem:[%s3 + $0x8] sm:$0xff]
        %v587 = vld [vmem:[%s3 + $0x10] sm:$0xff]
        %v588 = vld [vmem:[%s3 + $0x18] sm:$0xff]
        %v589 = vld [vmem:[%s4] sm:$0x1]
        %v591 = vperm.slane %v589, 0
        %vm593 = vcmask 261120
        %v595 = vsel %vm593, %v553, 0
        %v598 = vsel %vm593, %v554, 0
        %v601 = vsel %vm593, %v555, 0
        %v604 = vsel %vm593, %v556, 0
        %v607 = vsel %vm593, %v557, 0
        %v610 = vsel %vm593, %v558, 0
        %v613 = vsel %vm593, %v559, 0
        %v616 = vsel %vm593, %v560, 0
        %v619 = vsel %vm593, %v561, 0
        %v622 = vsel %vm593, %v562, 0
        %v625 = vsel %vm593, %v563, 0
        %v628 = vsel %vm593, %v564, 0
        %v631 = vsel %vm593, %v565, 0
        %v634 = vsel %vm593, %v566, 0
        %v637 = vsel %vm593, %v567, 0
        %v640 = vsel %vm593, %v568, 0
        %v643 = vsel %vm593, %v569, 0
        %v646 = vsel %vm593, %v570, 0
        %v649 = vsel %vm593, %v571, 0
        %v652 = vsel %vm593, %v572, 0
        %v655 = vsel %vm593, %v573, 0
        %v658 = vsel %vm593, %v574, 0
        %v661 = vsel %vm593, %v575, 0
        %v664 = vsel %vm593, %v576, 0
        %v667 = vsel %vm593, %v577, 0
        %v670 = vsel %vm593, %v578, 0
        %v673 = vsel %vm593, %v579, 0
        %v676 = vsel %vm593, %v580, 0
        %v679 = vsel %vm593, %v581, 0
        %v682 = vsel %vm593, %v582, 0
        %v685 = vsel %vm593, %v583, 0
        %v688 = vsel %vm593, %v584, 0
        %690 = vmatpush.msra.mxu0 0.0
        %691 = vmatpush.msra.mxu0 0.0
        %692 = vmatpush.msra.mxu0 0.0
        %693 = vmatpush.msra.mxu0 0.0
        %694 = vmatpush.msra.mxu0 0.0
        %695 = vmatpush.msra.mxu0 0.0
        %696 = vmatpush.msra.mxu0 0.0
        %697 = vmatpush.msra.mxu0 0.0
        %698 = vmatpush.msra.mxu0 0.0
        %699 = vmatpush.msra.mxu0 0.0
        %700 = vmatpush.msra.mxu0 0.0
        %701 = vmatpush.msra.mxu0 0.0
        %702 = vmatpush.msra.mxu0 %v588
        %703 = vmatpush.msra.mxu0 %v587
        %704 = vmatpush.msra.mxu0 %v586
        %705 = vmatpush.msra.mxu0 %v585
        %706 = vmatmul.f32.gmra.mxu0 %v595
        %v707 = vpop.f32.mrf.mxu0
        %v708 = vadd.f32 %v591, %v707
        %709 = vmatmul.f32.gmra.mxu0 %v598
        %v710 = vpop.f32.mrf.mxu0
        %v711 = vadd.f32 %v591, %v710
        %712 = vmatmul.f32.gmra.mxu0 %v601
        %v713 = vpop.f32.mrf.mxu0
        %v714 = vadd.f32 %v591, %v713
        %715 = vmatmul.f32.gmra.mxu0 %v604
        %v716 = vpop.f32.mrf.mxu0
        %v717 = vadd.f32 %v591, %v716
        %718 = vmatmul.f32.gmra.mxu0 %v607
        %v719 = vpop.f32.mrf.mxu0
        %v720 = vadd.f32 %v591, %v719
        %721 = vmatmul.f32.gmra.mxu0 %v610
        %v722 = vpop.f32.mrf.mxu0
        %v723 = vadd.f32 %v591, %v722
        %724 = vmatmul.f32.gmra.mxu0 %v613
        %v725 = vpop.f32.mrf.mxu0
        %v726 = vadd.f32 %v591, %v725
        %727 = vmatmul.f32.gmra.mxu0 %v616
        %v728 = vpop.f32.mrf.mxu0
        %v729 = vadd.f32 %v591, %v728
        %730 = vmatmul.f32.gmra.mxu0 %v619
        %v731 = vpop.f32.mrf.mxu0
        %v732 = vadd.f32 %v591, %v731
        %733 = vmatmul.f32.gmra.mxu0 %v622
        %v734 = vpop.f32.mrf.mxu0
        %v735 = vadd.f32 %v591, %v734
        %736 = vmatmul.f32.gmra.mxu0 %v625
        %v737 = vpop.f32.mrf.mxu0
        %v738 = vadd.f32 %v591, %v737
        %739 = vmatmul.f32.gmra.mxu0 %v628
        %v740 = vpop.f32.mrf.mxu0
        %v741 = vadd.f32 %v591, %v740
        %742 = vmatmul.f32.gmra.mxu0 %v631
        %v743 = vpop.f32.mrf.mxu0
        %v744 = vadd.f32 %v591, %v743
        %745 = vmatmul.f32.gmra.mxu0 %v634
        %v746 = vpop.f32.mrf.mxu0
        %v747 = vadd.f32 %v591, %v746
        %748 = vmatmul.f32.gmra.mxu0 %v637
        %v749 = vpop.f32.mrf.mxu0
        %v750 = vadd.f32 %v591, %v749
        %751 = vmatmul.f32.gmra.mxu0 %v640
        %v752 = vpop.f32.mrf.mxu0
        %v753 = vadd.f32 %v591, %v752
        %754 = vmatmul.f32.gmra.mxu0 %v643
        %v755 = vpop.f32.mrf.mxu0
        %v756 = vadd.f32 %v591, %v755
        %757 = vmatmul.f32.gmra.mxu0 %v646
        %v758 = vpop.f32.mrf.mxu0
        %v759 = vadd.f32 %v591, %v758
        %760 = vmatmul.f32.gmra.mxu0 %v649
        %v761 = vpop.f32.mrf.mxu0
        %v762 = vadd.f32 %v591, %v761
        %763 = vmatmul.f32.gmra.mxu0 %v652
        %v764 = vpop.f32.mrf.mxu0
        %v765 = vadd.f32 %v591, %v764
        %766 = vmatmul.f32.gmra.mxu0 %v655
        %v767 = vpop.f32.mrf.mxu0
        %v768 = vadd.f32 %v591, %v767
        %769 = vmatmul.f32.gmra.mxu0 %v658
        %v770 = vpop.f32.mrf.mxu0
        %v771 = vadd.f32 %v591, %v770
        %772 = vmatmul.f32.gmra.mxu0 %v661
        %v773 = vpop.f32.mrf.mxu0
        %v774 = vadd.f32 %v591, %v773
        %775 = vmatmul.f32.gmra.mxu0 %v664
        %v776 = vpop.f32.mrf.mxu0
        %v777 = vadd.f32 %v591, %v776
        %778 = vmatmul.f32.gmra.mxu0 %v667
        %v779 = vpop.f32.mrf.mxu0
        %v780 = vadd.f32 %v591, %v779
        %781 = vmatmul.f32.gmra.mxu0 %v670
        %v782 = vpop.f32.mrf.mxu0
        %v783 = vadd.f32 %v591, %v782
        %784 = vmatmul.f32.gmra.mxu0 %v673
        %v785 = vpop.f32.mrf.mxu0
        %v786 = vadd.f32 %v591, %v785
        %787 = vmatmul.f32.gmra.mxu0 %v676
        %v788 = vpop.f32.mrf.mxu0
        %v789 = vadd.f32 %v591, %v788
        %790 = vmatmul.f32.gmra.mxu0 %v679
        %v791 = vpop.f32.mrf.mxu0
        %v792 = vadd.f32 %v591, %v791
        %793 = vmatmul.f32.gmra.mxu0 %v682
        %v794 = vpop.f32.mrf.mxu0
        %v795 = vadd.f32 %v591, %v794
        %796 = vmatmul.f32.gmra.mxu0 %v685
        %v797 = vpop.f32.mrf.mxu0
        %v798 = vadd.f32 %v591, %v797
        %799 = vmatmul.f32.gmra.mxu0 %v688
        %v800 = vpop.f32.mrf.mxu0
        %v801 = vadd.f32 %v591, %v800
        %802 = vdwg.mxu0
        %v803 = vmax.f32 %v708, 0.0
        %v804 = vmax.f32 %v711, 0.0
        %v805 = vmax.f32 %v714, 0.0
        %v806 = vmax.f32 %v717, 0.0
        %v807 = vmax.f32 %v720, 0.0
        %v808 = vmax.f32 %v723, 0.0
        %v809 = vmax.f32 %v726, 0.0
        %v810 = vmax.f32 %v729, 0.0
        %v811 = vmax.f32 %v732, 0.0
        %v812 = vmax.f32 %v735, 0.0
        %v813 = vmax.f32 %v738, 0.0
        %v814 = vmax.f32 %v741, 0.0
        %v815 = vmax.f32 %v744, 0.0
        %v816 = vmax.f32 %v747, 0.0
        %v817 = vmax.f32 %v750, 0.0
        %v818 = vmax.f32 %v753, 0.0
        %v819 = vmax.f32 %v756, 0.0
        %v820 = vmax.f32 %v759, 0.0
        %v821 = vmax.f32 %v762, 0.0
        %v822 = vmax.f32 %v765, 0.0
        %v823 = vmax.f32 %v768, 0.0
        %v824 = vmax.f32 %v771, 0.0
        %v825 = vmax.f32 %v774, 0.0
        %v826 = vmax.f32 %v777, 0.0
        %v827 = vmax.f32 %v780, 0.0
        %v828 = vmax.f32 %v783, 0.0
        %v829 = vmax.f32 %v786, 0.0
        %v830 = vmax.f32 %v789, 0.0
        %v831 = vmax.f32 %v792, 0.0
        %v832 = vmax.f32 %v795, 0.0
        %v833 = vmax.f32 %v798, 0.0
        %v834 = vmax.f32 %v801, 0.0
        %v835 = vld [vmem:[%s5] sm:$0x1]
        %v836 = vld [vmem:[#allocation2] sm:$0x1]
        %838 = vset.pattern.permute.xlu0 0
        %839 = vperm.xlu0 %838, %v836
        %v840 = vpop.permute.xlu0 %839
        %v842 = vperm.slane %v840, 0
        %v844 = vsel %vm593, %v835, 0
        %v847 = vsel %vm593, %v803, 0
        %v850 = vsel %vm593, %v804, 0
        %v853 = vsel %vm593, %v805, 0
        %v856 = vsel %vm593, %v806, 0
        %v859 = vsel %vm593, %v807, 0
        %v862 = vsel %vm593, %v808, 0
        %v865 = vsel %vm593, %v809, 0
        %v868 = vsel %vm593, %v810, 0
        %v871 = vsel %vm593, %v811, 0
        %v874 = vsel %vm593, %v812, 0
        %v877 = vsel %vm593, %v813, 0
        %v880 = vsel %vm593, %v814, 0
        %v883 = vsel %vm593, %v815, 0
        %v886 = vsel %vm593, %v816, 0
        %v889 = vsel %vm593, %v817, 0
        %v892 = vsel %vm593, %v818, 0
        %v895 = vsel %vm593, %v819, 0
        %v898 = vsel %vm593, %v820, 0
        %v901 = vsel %vm593, %v821, 0
        %v904 = vsel %vm593, %v822, 0
        %v907 = vsel %vm593, %v823, 0
        %v910 = vsel %vm593, %v824, 0
        %v913 = vsel %vm593, %v825, 0
        %v916 = vsel %vm593, %v826, 0
        %v919 = vsel %vm593, %v827, 0
        %v922 = vsel %vm593, %v828, 0
        %v925 = vsel %vm593, %v829, 0
        %v928 = vsel %vm593, %v830, 0
        %v931 = vsel %vm593, %v831, 0
        %v934 = vsel %vm593, %v832, 0
        %v937 = vsel %vm593, %v833, 0
        %v940 = vsel %vm593, %v834, 0
        %942 = vmatpush.xpose.msra.mxu0 %v892
        %943 = vmatpush.xpose.msra.mxu0 %v889
        %944 = vmatpush.xpose.msra.mxu0 %v886
        %945 = vmatpush.xpose.msra.mxu0 %v883
        %946 = vmatpush.xpose.msra.mxu0 %v880
        %947 = vmatpush.xpose.msra.mxu0 %v877
        %948 = vmatpush.xpose.msra.mxu0 %v874
        %949 = vmatpush.xpose.msra.mxu0 %v871
        %950 = vmatpush.xpose.msra.mxu0 %v868
        %951 = vmatpush.xpose.msra.mxu0 %v865
        %952 = vmatpush.xpose.msra.mxu0 %v862
        %953 = vmatpush.xpose.msra.mxu0 %v859
        %954 = vmatpush.xpose.msra.mxu0 %v856
        %955 = vmatpush.xpose.msra.mxu0 %v853
        %956 = vmatpush.xpose.msra.mxu0 %v850
        %957 = vmatpush.xpose.msra.mxu0 %v847
        %958 = vmatmul.f32.gmra.mxu0 %v844
        %v959 = vpop.f32.mrf.mxu0
        %v960 = vadd.f32 %v842, %v959
        %961 = vdwg.mxu0
        %962 = vmatpush.xpose.msra.mxu0 %v940
        %963 = vmatpush.xpose.msra.mxu0 %v937
        %964 = vmatpush.xpose.msra.mxu0 %v934
        %965 = vmatpush.xpose.msra.mxu0 %v931
        %966 = vmatpush.xpose.msra.mxu0 %v928
        %967 = vmatpush.xpose.msra.mxu0 %v925
        %968 = vmatpush.xpose.msra.mxu0 %v922
        %969 = vmatpush.xpose.msra.mxu0 %v919
        %970 = vmatpush.xpose.msra.mxu0 %v916
        %971 = vmatpush.xpose.msra.mxu0 %v913
        %972 = vmatpush.xpose.msra.mxu0 %v910
        %973 = vmatpush.xpose.msra.mxu0 %v907
        %974 = vmatpush.xpose.msra.mxu0 %v904
        %975 = vmatpush.xpose.msra.mxu0 %v901
        %976 = vmatpush.xpose.msra.mxu0 %v898
        %977 = vmatpush.xpose.msra.mxu0 %v895
        %978 = vmatmul.f32.gmra.mxu0 %v844
        %v979 = vpop.f32.mrf.mxu0
        %v980 = vadd.f32 %v842, %v979
        %981 = vdwg.mxu0
        %v984 = vrot.slane %v980, 7
        %vm985 = vcmask 1040384
        %v986 = vsel %vm985, %v960, %v984
        %v988 = vlaneseq
        %vm989 = vcmp.ge.s32.totalorder %v988, 0
        %vm990 = vcmp.lt.s32.totalorder %v988, 256
        %vm991 = vmand %vm989, %vm990
        %992 = vst.msk [vmem:[%s286] sm:$0x3] %vm991, %v986
        %s993 = sand.u32 %s183, 1
        %s994 = scalar_lea.sflag [#allocation4], %s993
        %s995 = sand.u32 %s183, 1
        %s996 = smul.addr %s995, 2
        %s997 = scalar_lea.vmem [#allocation3], %s996
        // Predicated region
        $region49: #{tpu_custom_call.1} parent=47 // pred_check
          %p998 = pneg %p193
        $region50: #{tpu_custom_call.1} parent=47 // pred_check_branch
          %1000 = sbr.rel (%p998) target = $region52
        $region51: #{tpu_custom_call.1} parent=47 // pred_region
          %s1001 = smul.u32 2, %s23
          %s1002 = ssub.s32 3, %s1001
          %p1003 = scmp.lt.s32.totalorder %s1002, 2
          %s1004 = scalar_select %p1003, %s1002, 2
          %s1005 = ssub.s32 2, %s1004
          %s1006 = sshll.u32 %s1005, 4
          %1007 = vsyncadd %s994, %s1006
          %p1008 = scmp.ne.s32.totalorder 0, %s1004
          %s1009 = scalar_lea.hbm %s7, %s1001
          %s1010 = sshll.u32 %s1004, 4
          %s1011 = sshll.u32 %s997, 4
          %s1012 = int_to_ptr.vmem [resolvable:$true] %s1011
          %s1013 = sshll.u32 %s1009, 4
          %s1014 = int_to_ptr.hbm [resolvable:$true] %s1013
          %1016 = dma.vmem_to_hbm [thread:$0]  (%p1008), %s1012, %s1010, %s1014, %s994
        $region52: #{tpu_custom_call.1} parent=47 // pred_fallthru
          _
      $region48: #{tpu_custom_call.1} parent=5 // pred_fallthru
        _
      %p1017 = scmp.le.s32.totalorder 2, %s18
      // Predicated region
      $region53: #{tpu_custom_call.1} parent=5 // pred_check
        %p1018 = pneg %p1017
      $region54: #{tpu_custom_call.1} parent=5 // pred_check_branch
        %1020 = sbr.rel (%p1018) target = $region56
      $region55: #{tpu_custom_call.1} parent=5 // pred_region
        %s1021 = ssub.s32 %s18, 2
        // Predicated region
        $region57: #{tpu_custom_call.1} parent=55 // pred_check
          %p1022 = pneg %p199
        $region58: #{tpu_custom_call.1} parent=55 // pred_check_branch
          %1024 = sbr.rel (%p1022) target = $region60
        $region59: #{tpu_custom_call.1} parent=55 // pred_region
          %s1025 = sand.u32 %s184, 1
          %s1026 = scalar_lea.sflag [#allocation4], %s1025
          %s1027 = sand.u32 %s184, 1
          %s1028 = smul.addr %s1027, 2
          %s1029 = scalar_lea.vmem [#allocation3], %s1028
          %1031 = dma.done %s1026, 32
        $region60: #{tpu_custom_call.1} parent=55 // pred_fallthru
          _
      $region56: #{tpu_custom_call.1} parent=5 // pred_fallthru
        _
    $region6: #{tpu_custom_call.1} parent=1 // loop_footer
      %s22 = sadd.s32 1, %s18
    $region7: #{tpu_custom_call.1} parent=1 // loop_footer_branch
      %17 = sbr.rel target = $region3
    $region8: #{tpu_custom_call.1} parent=1 // loop_exit
      _
    %1032 = vsyncpa [#allocation4], 1
    %s1033 = scalar_lea.sflag [#allocation4], 1
    %1034 = vsyncpa %s1033, 1

</llo_original>
